<compile_context>
chip_gen: v5e
topology: v5e:2x2
jax: 0.10.0
libtpu: 0.0.40
codegen_flags: <defaults>
</compile_context>

<pallas_src>
import math

import jax
import jax.numpy as jnp
from jax.experimental import pallas as pl
from jax.experimental.pallas import tpu as pltpu


def _build_pe(max_len: int, d_model: int) -> jnp.ndarray:
    """Sinusoidal positional-encoding buffer, shape (max_len, d_model), f32."""
    position = jnp.arange(max_len, dtype=jnp.float32)[:, None]               # (max_len, 1)
    div_term = jnp.exp(
        jnp.arange(0, d_model, 2, dtype=jnp.float32) * (-math.log(10000.0) / d_model)
    )                                                                         # (ceil(D/2),)
    angles = position * div_term                                              # (max_len, ceil(D/2))
    pe = jnp.zeros((max_len, d_model), dtype=jnp.float32)
    pe = pe.at[:, 0::2].set(jnp.sin(angles))
    pe = pe.at[:, 1::2].set(jnp.cos(angles[:, : d_model // 2]))               # handles odd d_model
    return pe


def _add_pe_kernel(x_ref, pe_ref, o_ref):
    # x_ref / o_ref: (B, CHUNK); pe_ref: (1, CHUNK) -> cheap sublane broadcast.
    o_ref[...] = x_ref[...] + pe_ref[...]


# Per-tile budget for the x block (f32 bytes).  Sized for v7x (64 MiB physical
# VMEM, 32 MiB scoped default): with double-buffered x-in, out, and pe streams
# total VMEM stays < ~20 MiB, so no vmem_limit override beyond the default is
# required on any generation; v6e/v5e (128 MiB) are comfortably covered.
_TARGET_X_TILE_BYTES = 4 * 1024 * 1024


def positional_encoding_forward(x: jnp.ndarray, pe_full: jnp.ndarray) -> jnp.ndarray:
    """x: (B, S, D); pe_full: (max_len, D).  Returns x + pe[None, :S, :]."""
    B, S, D = x.shape
    flat = S * D

    # Wrapper-side layout plumbing: lane-dense flattened views + dtype match.
    pe2 = pe_full[:S, :].astype(x.dtype).reshape(1, flat)
    x2 = x.reshape(B, flat)

    itemsize = jnp.dtype(x.dtype).itemsize
    if flat % 128 == 0:
        chunk = (_TARGET_X_TILE_BYTES // (max(B, 1) * itemsize)) // 128 * 128
        chunk = int(max(128, min(flat, chunk)))
    else:
        # Fallback: full-width block (still correct; full-dim blocks are allowed).
        chunk = flat
    grid = (pl.cdiv(flat, chunk),)

    out = pl.pallas_call(
        _add_pe_kernel,
        out_shape=jax.ShapeDtypeStruct((B, flat), x.dtype),
        grid_spec=pl.GridSpec(
            grid=grid,
            in_specs=[
                pl.BlockSpec((B, chunk), lambda j: (0, j)),   # x tile
                pl.BlockSpec((1, chunk), lambda j: (0, j)),   # shared pe tile
            ],
            out_specs=pl.BlockSpec((B, chunk), lambda j: (0, j)),
        ),
        compiler_params=pltpu.CompilerParams(
            dimension_semantics=("parallel",),
            vmem_limit_bytes=32 * 1024 * 1024,
        ),
        input_output_aliases={0: 0},   # op is x += pe; reuse x's HBM buffer
    )(x2, pe2)

    return out.reshape(B, S, D)


if __name__ == "__main__":
    cfg = {"d_model": 32, "max_len": 64}
    B, S, D = 2, 8, cfg["d_model"]

    key = jax.random.PRNGKey(0)
    x = jax.random.normal(key, (B, S, D), dtype=jnp.float32)

    pe_full = _build_pe(cfg["max_len"], cfg["d_model"])

    # Reference (pure JAX), computed before the (aliased) kernel call.
    ref = x + pe_full[None, :S, :].astype(x.dtype)

    out = positional_encoding_forward(x, pe_full)
    out = jax.block_until_ready(out)

    assert out.shape == (B, S, D)
    assert jnp.allclose(out, ref, atol=1e-6), "mismatch vs reference"

    print("KERNEL_OK")
</pallas_src>

<mosaic_0001>
module attributes {stable_mosaic.version = 11 : i64} {
  func.func @_add_pe_kernel(%arg0: i32, %arg1: memref<2x256xf32, #tpu.memory_space<vmem>>, %arg2: memref<1x256xf32, #tpu.memory_space<vmem>>, %arg3: memref<2x256xf32, #tpu.memory_space<vmem>>) attributes {dimension_semantics = [#tpu.dimension_semantics<parallel>], iteration_bounds = array<i64: 1>, scalar_prefetch = 0 : i64, scratch_operands = 0 : i64, tpu.core_type = #tpu.core_type<tc>, window_params = [{transform_indices = @transform_0, window_bounds = array<i64: 2, 256>}, {transform_indices = @transform_1, window_bounds = array<i64: 1, 256>}, {transform_indices = @transform_2, window_bounds = array<i64: 2, 256>}]} {
    %c0 = arith.constant 0 : index
    %c0_0 = arith.constant 0 : index
    %0 = vector.load %arg1[%c0, %c0_0] : memref<2x256xf32, #tpu.memory_space<vmem>>, vector<2x256xf32>
    %c0_1 = arith.constant 0 : index
    %c0_2 = arith.constant 0 : index
    %1 = vector.load %arg2[%c0_1, %c0_2] : memref<1x256xf32, #tpu.memory_space<vmem>>, vector<1x256xf32>
    %2 = vector.broadcast %1 : vector<1x256xf32> to vector<2x256xf32>
    %3 = arith.addf %0, %2 : vector<2x256xf32>
    %c0_3 = arith.constant 0 : index
    %c0_4 = arith.constant 0 : index
    %4 = vector.load %arg3[%c0_3, %c0_4] : memref<2x256xf32, #tpu.memory_space<vmem>>, vector<2x256xf32>
    tpu.vector_store %arg3[%c0_3, %c0_4], %3 {strides = array<i32>} : memref<2x256xf32, #tpu.memory_space<vmem>>, vector<2x256xf32>,
    return
  }
  func.func @transform_0(%arg0: i32) -> (i32, i32) {
    %c0_i32 = arith.constant 0 : i32
    %c0_i32_0 = arith.constant 0 : i32
    return %c0_i32, %arg0 : i32, i32
  }
  func.func @transform_1(%arg0: i32) -> (i32, i32) {
    %c0_i32 = arith.constant 0 : i32
    %c0_i32_0 = arith.constant 0 : i32
    return %c0_i32, %arg0 : i32, i32
  }
  func.func @transform_2(%arg0: i32) -> (i32, i32) {
    %c0_i32 = arith.constant 0 : i32
    %c0_i32_0 = arith.constant 0 : i32
    return %c0_i32, %arg0 : i32, i32
  }
}

</mosaic_0001>

<llo_original>
// kernel: tpu_custom_call.1
$region0: #{tpu_custom_call.1}
  #allocation0 [shape = 'u32[]', space=smem, size = 0x4, offset = 0x4, fixed_abs, tag = 'smem constant byte address 0x4 - core index']
  #allocation1 [shape = 'u32[72,128]{1,0:T(1,128)}', space=vmem, size = 0x9000, scoped, tag = 'internal scratch']
  %s0 = inlined_call_operand.hbm [shape: f32[2,256], index: 0, kind: input, shape index: {}, may-alias: {0,2}]
  %s1 = inlined_call_operand.vmem [shape: f32[1,256], index: 1, kind: input, shape index: {}]
  %s2 = inlined_call_operand.hbm [shape: f32[2,256], index: 2, kind: output, shape index: {}, may-alias: {0,2}]
  %s3 = sld [smem:[#allocation0]]
  $region22: #{tpu_custom_call.1} parent=0
    _
  %s5 = ssub.s32 1, %s3
  %s6 = scalar_select 0, %s5, %s3
  $region1: #{tpu_custom_call.1} parent=0
    #allocation2 [shape = 'u8[2048]{0}', space=vmem, size = 0x800, scoped, tag = 'input window, operand 0, single buffered']
    #allocation3 [shape = 's32[1]{0}', space=sflag, size = 0x4, scoped, tag = 'scoped memory for tpu_custom_call.1']
    #allocation4 [shape = 's32[1]{0}', space=sflag, size = 0x4, scoped, tag = 'scoped memory for tpu_custom_call.1']
    #allocation5 [shape = 'u8[2048]{0}', space=vmem, size = 0x800, scoped, tag = 'output window, operand 0, single buffered']
    %7 = vsyncpa [#allocation3], 0
    %8 = vsyncpa [#allocation4], 0
    // Predicated region
    $region2: #{tpu_custom_call.1} parent=1 // pred_check
      _
    $region3: #{tpu_custom_call.1} parent=1 // pred_check_branch
      %10 = sbr.rel (0) target = $region5
    $region4: #{tpu_custom_call.1} parent=1 // pred_region
      %12 = vsyncadd [#allocation3], 0
      %s14 = sshll.u32 %s0, 4
      %s15 = int_to_ptr.hbm [resolvable:$true] %s14
      %s16 = sshll.u32 [#allocation2], 4
      %s17 = int_to_ptr.vmem [resolvable:$true] %s16
      %19 = dma.hbm_to_vmem [thread:$0]  %s15, 64, %s17, [#allocation3]
    $region5: #{tpu_custom_call.1} parent=1 // pred_fallthru
      _
    // Predicated region
    $region6: #{tpu_custom_call.1} parent=1 // pred_check
      _
    $region7: #{tpu_custom_call.1} parent=1 // pred_check_branch
      %21 = sbr.rel (0) target = $region9
    $region8: #{tpu_custom_call.1} parent=1 // pred_region
      _
    $region9: #{tpu_custom_call.1} parent=1 // pred_fallthru
      _
    // Predicated region
    $region10: #{tpu_custom_call.1} parent=1 // pred_check
      _
    $region11: #{tpu_custom_call.1} parent=1 // pred_check_branch
      %23 = sbr.rel (0) target = $region13
    $region12: #{tpu_custom_call.1} parent=1 // pred_region
      %25 = dma.done [#allocation3], 64
    $region13: #{tpu_custom_call.1} parent=1 // pred_fallthru
      _
    %v26 = vld [vmem:[#allocation2] sm:$0xf]
    %v27 = vld [vmem:[%s1] sm:$0x3]
    %v29 = vperm.slane %v27, 0
    %v30 = vperm.slane %v27, 1
    %v31 = vrot.slane %v30, 6
    %vm32 = vcmask 1041408
    %v33 = vsel %vm32, %v29, %v31
    %v35 = vadd.f32 %v26, %v33
    %36 = vst [vmem:[#allocation5] sm:$0xf] %v35
    // Predicated region
    $region14: #{tpu_custom_call.1} parent=1 // pred_check
      _
    $region15: #{tpu_custom_call.1} parent=1 // pred_check_branch
      %38 = sbr.rel (0) target = $region17
    $region16: #{tpu_custom_call.1} parent=1 // pred_region
      %40 = vsyncadd [#allocation4], 0
      %s42 = sshll.u32 [#allocation5], 4
      %s43 = int_to_ptr.vmem [resolvable:$true] %s42
      %s44 = sshll.u32 %s2, 4
      %s45 = int_to_ptr.hbm [resolvable:$true] %s44
      %47 = dma.vmem_to_hbm [thread:$0]  %s43, 64, %s45, [#allocation4]
    $region17: #{tpu_custom_call.1} parent=1 // pred_fallthru
      _
    // Predicated region
    $region18: #{tpu_custom_call.1} parent=1 // pred_check
      _
    $region19: #{tpu_custom_call.1} parent=1 // pred_check_branch
      %49 = sbr.rel (0) target = $region21
    $region20: #{tpu_custom_call.1} parent=1 // pred_region
      %51 = dma.done [#allocation4], 64
    $region21: #{tpu_custom_call.1} parent=1 // pred_fallthru
      _
    %52 = vsyncpa [#allocation3], 1
    %53 = vsyncpa [#allocation4], 1

</llo_original>
